<compile_context>
chip_gen: v7x
topology: tpu7x:2x2x1
jax: 0.10.0
libtpu: 0.0.40
codegen_flags: <defaults>
</compile_context>

<pallas_src>
import functools

import jax
import jax.numpy as jnp
from jax.experimental import pallas as pl
from jax.experimental.pallas import tpu as pltpu


def _round_up(x: int, m: int) -> int:
    return ((x + m - 1) // m) * m


def _res_layer_kernel(x_ref, w1_ref, b1_ref, w2_ref, b2_ref, o_ref):
    # Activation tile for this grid step: (block_b, d_in)
    xf = x_ref[...].astype(jnp.float32)

    # fc1(tanh(x))  -- tanh kept in f32 (EUP path; avoids bf16 VPU issues on v5e)
    h = jnp.tanh(xf)
    h = jnp.dot(h.astype(w1_ref.dtype), w1_ref[...],
                preferred_element_type=jnp.float32)
    h = h + b1_ref[...].astype(jnp.float32)

    # fc2(tanh(h))
    h = jnp.tanh(h)
    out = jnp.dot(h.astype(w2_ref.dtype), w2_ref[...],
                  preferred_element_type=jnp.float32)
    out = out + b2_ref[...].astype(jnp.float32)

    # residual add, single downcast at the end
    o_ref[...] = (xf + out).astype(o_ref.dtype)


@functools.partial(jax.jit, static_argnames=("block_b", "donate_x"))
def res_layer(x, w1_t, b1, w2_t, b2, *, block_b=None, donate_x=False):
    """x: (B, D_in); w1_t: (D_in, D_hid); b1: (1, D_hid);
       w2_t: (D_hid, D_out); b2: (1, D_out).  Requires D_out == D_in.

    donate_x: alias the x buffer as the output buffer.  Only enable when the
    caller actually donates x (otherwise XLA inserts a defensive copy)."""
    B, d_in = x.shape
    d_in_w, d_hid = w1_t.shape
    d_hid_w, d_out = w2_t.shape
    assert d_in_w == d_in and d_hid_w == d_hid
    assert d_out == d_in, "residual add requires dim_out == dim_in"

    act_bytes = jnp.dtype(x.dtype).itemsize
    w_bytes = jnp.dtype(w1_t.dtype).itemsize
    weight_vmem = (d_in * d_hid + d_hid * d_out + d_hid + d_out) * w_bytes

    # ---- generation-aware VMEM budget ----
    try:
        vmem_cap = int(pltpu.get_tpu_info().vmem_capacity_bytes)
    except Exception:
        vmem_cap = 64 * 1024 * 1024  # conservative (v7x-sized) fallback
    # Scoped cap: leave headroom for compiler scratch / semaphores.
    #   64 MiB part (v7x)      -> 48 MiB
    #   128 MiB part (v5e/v6e) -> 96 MiB
    scoped_cap = min(int(0.75 * vmem_cap), vmem_cap - 16 * 1024 * 1024)

    # ---- batch tile selection ----
    if block_b is None:
        # Per-row VMEM cost: double-buffered x and out tiles + f32 temps.
        per_row = ((2 * d_in + 2 * d_out) * act_bytes
                   + (d_in + d_hid + d_out) * 4)
        budget = max(scoped_cap // 2 - weight_vmem, 1 << 20)
        block_b = budget // per_row
        block_b = min(block_b, 4096)  # diminishing returns past a few K rows
        # keep >= 2 grid steps when possible (v7x megacore + pipeline overlap)
        block_b = min(block_b, _round_up(pl.cdiv(B, 2), 8))
    block_b = max(8, (int(block_b) // 8) * 8)   # sublane multiple
    block_b = min(block_b, _round_up(B, 8))

    # cdiv grid with a partial last block: no batch padding / wasted rows.
    # Rows beyond B in the last block read unspecified data, but the math is
    # strictly row-independent and those output rows are masked on store.
    grid = (pl.cdiv(B, block_b),)

    act_vmem = (2 * block_b * d_in * act_bytes      # x tiles (double-buffered)
                + 2 * block_b * d_out * act_bytes   # out tiles (double-buffered)
                + block_b * (d_in + d_hid + d_out) * 4)  # f32 intermediates
    needed = weight_vmem + act_vmem
    vmem_limit = int(min(scoped_cap,
                         max(needed * 5 // 4 + (2 << 20), 16 << 20)))

    cost = pl.CostEstimate(
        flops=2 * B * d_in * d_hid + 2 * B * d_hid * d_out,
        transcendentals=B * (d_in + d_hid),
        bytes_accessed=(2 * B * d_in * act_bytes
                        + (d_in * d_hid + d_hid * d_out + d_hid + d_out) * w_bytes),
    )

    return pl.pallas_call(
        _res_layer_kernel,
        out_shape=jax.ShapeDtypeStruct((B, d_out), x.dtype),
        grid_spec=pltpu.PrefetchScalarGridSpec(
            num_scalar_prefetch=0,
            grid=grid,
            in_specs=[
                # activations: pipelined batch tiles, true feature width
                # (last dim == full array dim -> (8,128) rule satisfied)
                pl.BlockSpec((block_b, d_in), lambda i: (i, 0)),
                # grid-invariant weights / biases: whole arrays resident in
                # VMEM, single-buffered (not run through the block pipeline)
                pl.BlockSpec(memory_space=pltpu.MemorySpace.VMEM),   # W1^T
                pl.BlockSpec(memory_space=pltpu.MemorySpace.VMEM),   # b1
                pl.BlockSpec(memory_space=pltpu.MemorySpace.VMEM),   # W2^T
                pl.BlockSpec(memory_space=pltpu.MemorySpace.VMEM),   # b2
            ],
            out_specs=pl.BlockSpec((block_b, d_out), lambda i: (i, 0)),
        ),
        compiler_params=pltpu.CompilerParams(
            dimension_semantics=("parallel",),
            vmem_limit_bytes=vmem_limit,
        ),
        cost_estimate=cost,
        input_output_aliases={0: 0} if donate_x else {},
    )(x, w1_t, b1, w2_t, b2)


def res_layer_ref(x, w1_t, b1, w2_t, b2):
    h = jnp.tanh(x)
    h = h @ w1_t + b1
    h = jnp.tanh(h)
    out = h @ w2_t + b2
    return x + out


if __name__ == "__main__":
    # Shapes consistent with the module: dim_in == dim_out (residual), hidden
    # arbitrary.  Small batch, but enough rows that the grid has >= 2 steps.
    B, D_IN, D_HID = 256, 32, 64
    D_OUT = D_IN

    key = jax.random.PRNGKey(0)
    kx, k1, kb1, k2, kb2 = jax.random.split(key, 5)

    x = jax.random.normal(kx, (B, D_IN), dtype=jnp.float32)

    # Deterministic "Kaiming-uniform-like" init matching nn.Linear shapes:
    # fc1.weight: (D_HID, D_IN)  -> stored transposed (D_IN, D_HID)
    # fc2.weight: (D_OUT, D_HID) -> stored transposed (D_HID, D_OUT)
    bound1 = 1.0 / (D_IN ** 0.5)
    bound2 = 1.0 / (D_HID ** 0.5)
    w1 = jax.random.uniform(k1, (D_HID, D_IN), minval=-bound1, maxval=bound1, dtype=jnp.float32)
    b1 = jax.random.uniform(kb1, (1, D_HID), minval=-bound1, maxval=bound1, dtype=jnp.float32)
    w2 = jax.random.uniform(k2, (D_OUT, D_HID), minval=-bound2, maxval=bound2, dtype=jnp.float32)
    b2 = jax.random.uniform(kb2, (1, D_OUT), minval=-bound2, maxval=bound2, dtype=jnp.float32)

    w1_t = w1.T  # (D_IN, D_HID)
    w2_t = w2.T  # (D_HID, D_OUT)

    # Even batch: auto block_b -> 128, grid = (2,)
    out = jax.block_until_ready(res_layer(x, w1_t, b1, w2_t, b2))
    ref = res_layer_ref(x, w1_t, b1, w2_t, b2)
    assert out.shape == (B, D_OUT)
    assert jnp.allclose(out, ref, atol=1e-5, rtol=1e-5), "mismatch vs reference"

    # Ragged batch: exercises the partial (masked) last block of the cdiv grid.
    B2 = 200
    x2 = x[:B2]
    out2 = jax.block_until_ready(res_layer(x2, w1_t, b1, w2_t, b2))
    ref2 = res_layer_ref(x2, w1_t, b1, w2_t, b2)
    assert out2.shape == (B2, D_OUT)
    assert jnp.allclose(out2, ref2, atol=1e-5, rtol=1e-5), "mismatch vs reference (ragged B)"

    print("KERNEL_OK")
</pallas_src>

<mosaic_0001>
module attributes {stable_mosaic.version = 11 : i64} {
  func.func @_res_layer_kernel(%arg0: i32, %arg1: memref<128x32xf32, #tpu.memory_space<vmem>>, %arg2: memref<32x64xf32, #tpu.memory_space<vmem>>, %arg3: memref<1x64xf32, #tpu.memory_space<vmem>>, %arg4: memref<64x32xf32, #tpu.memory_space<vmem>>, %arg5: memref<1x32xf32, #tpu.memory_space<vmem>>, %arg6: memref<128x32xf32, #tpu.memory_space<vmem>>) attributes {dimension_semantics = [#tpu.dimension_semantics<parallel>], iteration_bounds = array<i64: 2>, scalar_prefetch = 0 : i64, scratch_operands = 0 : i64, tpu.core_type = #tpu.core_type<tc>, window_params = [{transform_indices = @transform_0, window_bounds = array<i64: 128, 32>}, {pipeline_mode = #tpu.pipeline_mode<synchronous>, transform_indices = @transform_1, window_bounds = array<i64: 32, 64>}, {pipeline_mode = #tpu.pipeline_mode<synchronous>, transform_indices = @transform_2, window_bounds = array<i64: 1, 64>}, {pipeline_mode = #tpu.pipeline_mode<synchronous>, transform_indices = @transform_3, window_bounds = array<i64: 64, 32>}, {pipeline_mode = #tpu.pipeline_mode<synchronous>, transform_indices = @transform_4, window_bounds = array<i64: 1, 32>}, {transform_indices = @transform_5, window_bounds = array<i64: 128, 32>}]} {
    %c0 = arith.constant 0 : index
    %c0_0 = arith.constant 0 : index
    %0 = vector.load %arg1[%c0, %c0_0] : memref<128x32xf32, #tpu.memory_space<vmem>>, vector<128x32xf32>
    %1 = math.tanh %0 : vector<128x32xf32>
    %c0_1 = arith.constant 0 : index
    %c0_2 = arith.constant 0 : index
    %2 = vector.load %arg2[%c0_1, %c0_2] : memref<32x64xf32, #tpu.memory_space<vmem>>, vector<32x64xf32>
    %cst = arith.constant dense<0.000000e+00> : vector<128x64xf32>
    %3 = tpu.matmul %1, %2, %cst {dimension_numbers = #tpu.dot_dimension_numbers<[1], [0], [0], [1], [0, 0, 1, 1], [], []>} : vector<128x32xf32>, vector<32x64xf32>, vector<128x64xf32> -> vector<128x64xf32>
    %c0_3 = arith.constant 0 : index
    %c0_4 = arith.constant 0 : index
    %4 = vector.load %arg3[%c0_3, %c0_4] : memref<1x64xf32, #tpu.memory_space<vmem>>, vector<1x64xf32>
    %5 = vector.broadcast %4 : vector<1x64xf32> to vector<128x64xf32>
    %6 = arith.addf %3, %5 : vector<128x64xf32>
    %7 = math.tanh %6 : vector<128x64xf32>
    %c0_5 = arith.constant 0 : index
    %c0_6 = arith.constant 0 : index
    %8 = vector.load %arg4[%c0_5, %c0_6] : memref<64x32xf32, #tpu.memory_space<vmem>>, vector<64x32xf32>
    %cst_7 = arith.constant dense<0.000000e+00> : vector<128x32xf32>
    %9 = tpu.matmul %7, %8, %cst_7 {dimension_numbers = #tpu.dot_dimension_numbers<[1], [0], [0], [1], [0, 0, 1, 1], [], []>} : vector<128x64xf32>, vector<64x32xf32>, vector<128x32xf32> -> vector<128x32xf32>
    %c0_8 = arith.constant 0 : index
    %c0_9 = arith.constant 0 : index
    %10 = vector.load %arg5[%c0_8, %c0_9] : memref<1x32xf32, #tpu.memory_space<vmem>>, vector<1x32xf32>
    %11 = vector.broadcast %10 : vector<1x32xf32> to vector<128x32xf32>
    %12 = arith.addf %9, %11 : vector<128x32xf32>
    %13 = arith.addf %0, %12 : vector<128x32xf32>
    %c0_10 = arith.constant 0 : index
    %c0_11 = arith.constant 0 : index
    %14 = vector.load %arg6[%c0_10, %c0_11] : memref<128x32xf32, #tpu.memory_space<vmem>>, vector<128x32xf32>
    tpu.vector_store %arg6[%c0_10, %c0_11], %13 {strides = array<i32>} : memref<128x32xf32, #tpu.memory_space<vmem>>, vector<128x32xf32>,
    return
  }
  func.func @transform_0(%arg0: i32) -> (i32, i32) {
    %c0_i32 = arith.constant 0 : i32
    %c0_i32_0 = arith.constant 0 : i32
    return %arg0, %c0_i32 : i32, i32
  }
  func.func @transform_1(%arg0: i32) -> (i32, i32) {
    %c0_i32 = arith.constant 0 : i32
    %c0_i32_0 = arith.constant 0 : i32
    %c0_i32_1 = arith.constant 0 : i32
    return %c0_i32, %c0_i32_0 : i32, i32
  }
  func.func @transform_2(%arg0: i32) -> (i32, i32) {
    %c0_i32 = arith.constant 0 : i32
    %c0_i32_0 = arith.constant 0 : i32
    %c0_i32_1 = arith.constant 0 : i32
    return %c0_i32, %c0_i32_0 : i32, i32
  }
  func.func @transform_3(%arg0: i32) -> (i32, i32) {
    %c0_i32 = arith.constant 0 : i32
    %c0_i32_0 = arith.constant 0 : i32
    %c0_i32_1 = arith.constant 0 : i32
    return %c0_i32, %c0_i32_0 : i32, i32
  }
  func.func @transform_4(%arg0: i32) -> (i32, i32) {
    %c0_i32 = arith.constant 0 : i32
    %c0_i32_0 = arith.constant 0 : i32
    %c0_i32_1 = arith.constant 0 : i32
    return %c0_i32, %c0_i32_0 : i32, i32
  }
  func.func @transform_5(%arg0: i32) -> (i32, i32) {
    %c0_i32 = arith.constant 0 : i32
    %c0_i32_0 = arith.constant 0 : i32
    return %arg0, %c0_i32 : i32, i32
  }
}

</mosaic_0001>

<llo_original>
// kernel: res_layer.1
$region0: #{res_layer.1}
  #allocation0 [shape = 'u32[]', space=smem, size = 0x4, offset = 0x4, fixed_abs, tag = 'smem constant byte address 0x4 - core index']
  #allocation1 [shape = 'u32[144,128]{1,0:T(1,128)}', space=vmem, size = 0x12000, scoped, tag = 'internal scratch']
  %s0 = inlined_call_operand.vmem [shape: f32[256,32], index: 0, kind: input, shape index: {}]
  %s1 = inlined_call_operand.vmem [shape: f32[32,64], index: 1, kind: input, shape index: {}]
  %s2 = inlined_call_operand.vmem [shape: f32[1,64], index: 2, kind: input, shape index: {}]
  %s3 = inlined_call_operand.vmem [shape: f32[64,32], index: 3, kind: input, shape index: {}]
  %s4 = inlined_call_operand.vmem [shape: f32[1,32], index: 4, kind: input, shape index: {}]
  %s5 = inlined_call_operand.vmem [shape: f32[256,32], index: 5, kind: output, shape index: {}]
  %s6 = sld [smem:[#allocation0]]
  $region53: #{res_layer.1} parent=0
    _
  %s8 = ssub.s32 1, %s6
  %s9 = scalar_select 0, %s8, %s6
  loop: start=0, step=1, limit=4
  $region2: #{res_layer.1} parent=0 // loop_pre_header
    _
  $region3: #{res_layer.1} parent=0 // loop_header
    %s11 = sphi 0, %s15
    %p12 = scmp.ge.s32.totalorder %s11, 4
    %s21 = sphi 0, %s23
    %s24 = sphi 0, %s21
    %s25 = sphi 0, %s24
    %s41 = sphi 0, %s25
    %s45 = sphi 0, %s45
    %s47 = sphi 0, %s45
    %s48 = sphi 0, %s47
    %s62 = sphi 0, %s48
    %s66 = sphi 0, %s66
    %s68 = sphi 0, %s66
    %s69 = sphi 0, %s68
    %s83 = sphi 0, %s69
    %s87 = sphi 0, %s87
    %s89 = sphi 0, %s87
    %s90 = sphi 0, %s89
    %s104 = sphi 0, %s90
    %s108 = sphi 0, %s108
    %s110 = sphi 0, %s108
    %s111 = sphi 0, %s110
    %s125 = sphi 0, %s111
    %s131 = sphi 0, %s133
    %s134 = sphi 0, %s131
    %s135 = sphi 0, %s134
    %s151 = sphi 0, %s135
  $region4: #{res_layer.1} parent=0 // loop_header_branch
    %14 = sbr.rel (%p12) target = $region8
  $region5: #{res_layer.1} parent=0 // loop_body
    %s16 = ssub.s32 %s11, 1
    %s17 = ssub.s32 %s11, 2
    %s18 = sadd.s32 %s11, 1
    %s19 = ssub.s32 %s11, %s18
    %p20 = scmp.eq.s32.totalorder %s19, 0
    %s22 = sadd.s32 %s21, 1
    %s23 = scalar_select %p20, %s21, %s22
    %p26 = pneg %p20
    %p27 = scmp.eq.s32.totalorder %s11, 1
    %p28 = por %p26, %p27
    %p29 = scmp.ne.s32.totalorder %s21, %s24
    %p30 = scmp.eq.s32.totalorder %s11, 0
    %p31 = por %p29, %p30
    %p32 = scmp.ne.s32.totalorder %s21, %s24
    %p33 = scmp.eq.s32.totalorder %s16, 1
    %p34 = por %p32, %p33
    %p35 = scmp.ne.s32.totalorder %s24, %s25
    %p36 = scmp.eq.s32.totalorder %s16, 0
    %p37 = por %p35, %p36
    %p38 = scmp.ne.s32.totalorder %s24, %s25
    %p39 = scmp.eq.s32.totalorder %s17, 1
    %p40 = por %p38, %p39
    %p42 = scmp.ne.s32.totalorder %s25, %s41
    %p43 = scmp.eq.s32.totalorder %s17, 0
    %p44 = por %p42, %p43
    %s46 = sadd.s32 %s45, 1
    %p49 = scmp.eq.s32.totalorder %s11, 1
    %p50 = scmp.ne.s32.totalorder %s45, %s47
    %p51 = scmp.eq.s32.totalorder %s11, 0
    %p52 = por %p50, %p51
    %p53 = scmp.ne.s32.totalorder %s45, %s47
    %p54 = scmp.eq.s32.totalorder %s16, 1
    %p55 = por %p53, %p54
    %p56 = scmp.ne.s32.totalorder %s47, %s48
    %p57 = scmp.eq.s32.totalorder %s16, 0
    %p58 = por %p56, %p57
    %p59 = scmp.ne.s32.totalorder %s47, %s48
    %p60 = scmp.eq.s32.totalorder %s17, 1
    %p61 = por %p59, %p60
    %p63 = scmp.ne.s32.totalorder %s48, %s62
    %p64 = scmp.eq.s32.totalorder %s17, 0
    %p65 = por %p63, %p64
    %s67 = sadd.s32 %s66, 1
    %p70 = scmp.eq.s32.totalorder %s11, 1
    %p71 = scmp.ne.s32.totalorder %s66, %s68
    %p72 = scmp.eq.s32.totalorder %s11, 0
    %p73 = por %p71, %p72
    %p74 = scmp.ne.s32.totalorder %s66, %s68
    %p75 = scmp.eq.s32.totalorder %s16, 1
    %p76 = por %p74, %p75
    %p77 = scmp.ne.s32.totalorder %s68, %s69
    %p78 = scmp.eq.s32.totalorder %s16, 0
    %p79 = por %p77, %p78
    %p80 = scmp.ne.s32.totalorder %s68, %s69
    %p81 = scmp.eq.s32.totalorder %s17, 1
    %p82 = por %p80, %p81
    %p84 = scmp.ne.s32.totalorder %s69, %s83
    %p85 = scmp.eq.s32.totalorder %s17, 0
    %p86 = por %p84, %p85
    %s88 = sadd.s32 %s87, 1
    %p91 = scmp.eq.s32.totalorder %s11, 1
    %p92 = scmp.ne.s32.totalorder %s87, %s89
    %p93 = scmp.eq.s32.totalorder %s11, 0
    %p94 = por %p92, %p93
    %p95 = scmp.ne.s32.totalorder %s87, %s89
    %p96 = scmp.eq.s32.totalorder %s16, 1
    %p97 = por %p95, %p96
    %p98 = scmp.ne.s32.totalorder %s89, %s90
    %p99 = scmp.eq.s32.totalorder %s16, 0
    %p100 = por %p98, %p99
    %p101 = scmp.ne.s32.totalorder %s89, %s90
    %p102 = scmp.eq.s32.totalorder %s17, 1
    %p103 = por %p101, %p102
    %p105 = scmp.ne.s32.totalorder %s90, %s104
    %p106 = scmp.eq.s32.totalorder %s17, 0
    %p107 = por %p105, %p106
    %s109 = sadd.s32 %s108, 1
    %p112 = scmp.eq.s32.totalorder %s11, 1
    %p113 = scmp.ne.s32.totalorder %s108, %s110
    %p114 = scmp.eq.s32.totalorder %s11, 0
    %p115 = por %p113, %p114
    %p116 = scmp.ne.s32.totalorder %s108, %s110
    %p117 = scmp.eq.s32.totalorder %s16, 1
    %p118 = por %p116, %p117
    %p119 = scmp.ne.s32.totalorder %s110, %s111
    %p120 = scmp.eq.s32.totalorder %s16, 0
    %p121 = por %p119, %p120
    %p122 = scmp.ne.s32.totalorder %s110, %s111
    %p123 = scmp.eq.s32.totalorder %s17, 1
    %p124 = por %p122, %p123
    %p126 = scmp.ne.s32.totalorder %s111, %s125
    %p127 = scmp.eq.s32.totalorder %s17, 0
    %p128 = por %p126, %p127
    %s129 = ssub.s32 %s11, %s18
    %p130 = scmp.eq.s32.totalorder %s129, 0
    %s132 = sadd.s32 %s131, 1
    %s133 = scalar_select %p130, %s131, %s132
    %p136 = pneg %p130
    %p137 = scmp.eq.s32.totalorder %s11, 1
    %p138 = por %p136, %p137
    %p139 = scmp.ne.s32.totalorder %s131, %s134
    %p140 = scmp.eq.s32.totalorder %s11, 0
    %p141 = por %p139, %p140
    %p142 = scmp.ne.s32.totalorder %s131, %s134
    %p143 = scmp.eq.s32.totalorder %s16, 1
    %p144 = por %p142, %p143
    %p145 = scmp.ne.s32.totalorder %s134, %s135
    %p146 = scmp.eq.s32.totalorder %s16, 0
    %p147 = por %p145, %p146
    %p148 = scmp.ne.s32.totalorder %s134, %s135
    %p149 = scmp.eq.s32.totalorder %s17, 1
    %p150 = por %p148, %p149
    %p152 = scmp.ne.s32.totalorder %s135, %s151
    %p153 = scmp.eq.s32.totalorder %s17, 0
    %p154 = por %p152, %p153
    %p155 = scmp.le.s32.totalorder 1, %s11
    %p156 = scmp.lt.s32.totalorder %s11, 3
    %p157 = pnand %p155, %p156
    %p158 = pneg %p157
    // Predicated region
    $region9: #{res_layer.1} parent=5 // pred_check
      _
    $region10: #{res_layer.1} parent=5 // pred_check_branch
      %160 = sbr.rel (%p157) target = $region12
    $region11: #{res_layer.1} parent=5 // pred_region
      %s161 = ssub.s32 %s11, 1
      // Predicated region
      $region13: #{res_layer.1} parent=11 // pred_check
        %p162 = pneg %p58
      $region14: #{res_layer.1} parent=11 // pred_check_branch
        %164 = sbr.rel (%p162) target = $region16
      $region15: #{res_layer.1} parent=11 // pred_region
        _
      $region16: #{res_layer.1} parent=11 // pred_fallthru
        _
      // Predicated region
      $region17: #{res_layer.1} parent=11 // pred_check
        %p165 = pneg %p79
      $region18: #{res_layer.1} parent=11 // pred_check_branch
        %167 = sbr.rel (%p165) target = $region20
      $region19: #{res_layer.1} parent=11 // pred_region
        _
      $region20: #{res_layer.1} parent=11 // pred_fallthru
        _
      // Predicated region
      $region21: #{res_layer.1} parent=11 // pred_check
        %p168 = pneg %p100
      $region22: #{res_layer.1} parent=11 // pred_check_branch
        %170 = sbr.rel (%p168) target = $region24
      $region23: #{res_layer.1} parent=11 // pred_region
        _
      $region24: #{res_layer.1} parent=11 // pred_fallthru
        _
      // Predicated region
      $region25: #{res_layer.1} parent=11 // pred_check
        %p171 = pneg %p121
      $region26: #{res_layer.1} parent=11 // pred_check_branch
        %173 = sbr.rel (%p171) target = $region28
      $region27: #{res_layer.1} parent=11 // pred_region
        _
      $region28: #{res_layer.1} parent=11 // pred_fallthru
        _
    $region12: #{res_layer.1} parent=5 // pred_fallthru
      _
    %p174 = scmp.lt.s32.totalorder %s11, 2
    // Predicated region
    $region29: #{res_layer.1} parent=5 // pred_check
      %p175 = pneg %p174
    $region30: #{res_layer.1} parent=5 // pred_check_branch
      %177 = sbr.rel (%p175) target = $region32
    $region31: #{res_layer.1} parent=5 // pred_region
      // Predicated region
      $region33: #{res_layer.1} parent=31 // pred_check
        %p178 = pneg %p31
      $region34: #{res_layer.1} parent=31 // pred_check_branch
        %180 = sbr.rel (%p178) target = $region36
      $region35: #{res_layer.1} parent=31 // pred_region
        %s181 = smul.u32 16, %s11
        %p182 = scmp.lt.s32.totalorder %s181, 31
        %s183 = scalar_select %p182, %s181, 31
        %s184 = smul.addr %s183, 8
        %s185 = scalar_lea.vmem %s0, %s184
        %s186 = smul.u32 16, %s11
      $region36: #{res_layer.1} parent=31 // pred_fallthru
        _
    $region32: #{res_layer.1} parent=5 // pred_fallthru
      _
    %p187 = scmp.le.s32.totalorder 1, %s11
    %p188 = scmp.lt.s32.totalorder %s11, 3
    %p189 = pnand %p187, %p188
    %p190 = pneg %p189
    // Predicated region
    $region37: #{res_layer.1} parent=5 // pred_check
      _
    $region38: #{res_layer.1} parent=5 // pred_check_branch
      %192 = sbr.rel (%p189) target = $region40
    $region39: #{res_layer.1} parent=5 // pred_region
      %s193 = ssub.s32 %s11, 1
      %s194 = smul.u32 16, %s16
      %p195 = scmp.lt.s32.totalorder %s194, 31
      %s196 = scalar_select %p195, %s194, 31
      %s197 = smul.addr %s196, 8
      %s198 = scalar_lea.vmem %s0, %s197
      %p199 = pneg %p37
      %p200 = pneg %p34
      %p201 = pneg %p58
      %p202 = pneg %p55
      %p203 = pneg %p79
      %p204 = pneg %p76
      %p205 = pneg %p100
      %p206 = pneg %p97
      %p207 = pneg %p121
      %p208 = pneg %p118
      %p209 = pneg %p147
      %p210 = pneg %p144
      %s211 = smul.u32 16, %s16
      %p212 = scmp.lt.s32.totalorder %s211, 31
      %s213 = scalar_select %p212, %s211, 31
      %s214 = smul.addr %s213, 8
      %s215 = scalar_lea.vmem %s5, %s214
      %s216 = smul.u32 16, %s16
      %p217 = scmp.lt.s32.totalorder %s216, 31
      %s218 = scalar_select %p217, %s216, 31
      %s219 = smul.addr %s218, 8
      %s220 = scalar_lea.vmem %s0, %s219
      %s221 = smul.u32 16, %s16
      %s222 = smul.u32 16, %s16
      %p223 = scmp.lt.s32.totalorder %s222, 31
      %s224 = scalar_select %p223, %s222, 31
      %s225 = smul.addr %s224, 8
      %s226 = scalar_lea.vmem %s5, %s225
      %s227 = smul.u32 16, %s16
      %v228 = vld [vmem:[%s220] sm:$0xff]
      %v229 = vld [vmem:[%s220 + $0x8] sm:$0xff]
      %v230 = vld [vmem:[%s220 + $0x10] sm:$0xff]
      %v231 = vld [vmem:[%s220 + $0x18] sm:$0xff]
      %v232 = vld [vmem:[%s220 + $0x20] sm:$0xff]
      %v233 = vld [vmem:[%s220 + $0x28] sm:$0xff]
      %v234 = vld [vmem:[%s220 + $0x30] sm:$0xff]
      %v235 = vld [vmem:[%s220 + $0x38] sm:$0xff]
      %v236 = vld [vmem:[%s220 + $0x40] sm:$0xff]
      %v237 = vld [vmem:[%s220 + $0x48] sm:$0xff]
      %v238 = vld [vmem:[%s220 + $0x50] sm:$0xff]
      %v239 = vld [vmem:[%s220 + $0x58] sm:$0xff]
      %v240 = vld [vmem:[%s220 + $0x60] sm:$0xff]
      %v241 = vld [vmem:[%s220 + $0x68] sm:$0xff]
      %v242 = vld [vmem:[%s220 + $0x70] sm:$0xff]
      %v243 = vld [vmem:[%s220 + $0x78] sm:$0xff]
      %v244 = vtanh.pop %v228
      %v245 = vtanh.pop %v229
      %v246 = vtanh.pop %v230
      %v247 = vtanh.pop %v231
      %v248 = vtanh.pop %v232
      %v249 = vtanh.pop %v233
      %v250 = vtanh.pop %v234
      %v251 = vtanh.pop %v235
      %v252 = vtanh.pop %v236
      %v253 = vtanh.pop %v237
      %v254 = vtanh.pop %v238
      %v255 = vtanh.pop %v239
      %v256 = vtanh.pop %v240
      %v257 = vtanh.pop %v241
      %v258 = vtanh.pop %v242
      %v259 = vtanh.pop %v243
      %v260 = vld [vmem:[%s1] sm:$0xff]
      %v261 = vld [vmem:[%s1 + $0x8] sm:$0xff]
      %v262 = vld [vmem:[%s1 + $0x10] sm:$0xff]
      %v263 = vld [vmem:[%s1 + $0x18] sm:$0xff]
      %v264 = vld [vmem:[%s2] sm:$0x1]
      %v266 = vlaneseq
      %v267 = vshrl.u32 %v266, 7
      %v268 = vsub.s32 0, %v267
      %v269 = vrot.slane %v264, %v268
      %vm271 = vcmask 261120
      %v273 = vsel %vm271, %v244, 0
      %v276 = vsel %vm271, %v245, 0
      %v279 = vsel %vm271, %v246, 0
      %v282 = vsel %vm271, %v247, 0
      %v285 = vsel %vm271, %v248, 0
      %v288 = vsel %vm271, %v249, 0
      %v291 = vsel %vm271, %v250, 0
      %v294 = vsel %vm271, %v251, 0
      %v297 = vsel %vm271, %v252, 0
      %v300 = vsel %vm271, %v253, 0
      %v303 = vsel %vm271, %v254, 0
      %v306 = vsel %vm271, %v255, 0
      %v309 = vsel %vm271, %v256, 0
      %v312 = vsel %vm271, %v257, 0
      %v315 = vsel %vm271, %v258, 0
      %v318 = vsel %vm271, %v259, 0
      %320 = vmatprep.subr.mxu0 0.0
      %321 = vmatpush1.msra.mxu0 %v260
      %322 = vmatprep.subr.mxu0 0.0
      %323 = vmatpush1.msra.mxu0 %v261
      %324 = vmatprep.subr.mxu0 0.0
      %325 = vmatpush1.msra.mxu0 %v262
      %326 = vmatprep.subr.mxu0 0.0
      %327 = vmatpush1.msra.mxu0 %v263
      %328 = vmatprep.subr.mxu0 0.0
      %329 = vmatpush1.msra.mxu0 0.0
      %330 = vmatprep.subr.mxu0 0.0
      %331 = vmatpush1.msra.mxu0 0.0
      %332 = vmatprep.subr.mxu0 0.0
      %333 = vmatpush1.msra.mxu0 0.0
      %334 = vmatprep.subr.mxu0 0.0
      %335 = vmatpush1.msra.mxu0 0.0
      %336 = vmatprep.subr.mxu0 0.0
      %337 = vmatpush1.msra.mxu0 0.0
      %338 = vmatprep.subr.mxu0 0.0
      %339 = vmatpush1.msra.mxu0 0.0
      %340 = vmatprep.subr.mxu0 0.0
      %341 = vmatpush1.msra.mxu0 0.0
      %342 = vmatprep.subr.mxu0 0.0
      %343 = vmatpush1.msra.mxu0 0.0
      %344 = vmatprep.subr.mxu0 0.0
      %345 = vmatpush1.msra.mxu0 0.0
      %346 = vmatprep.subr.mxu0 0.0
      %347 = vmatpush1.msra.mxu0 0.0
      %348 = vmatprep.subr.mxu0 0.0
      %349 = vmatpush1.msra.mxu0 0.0
      %350 = vmatprep.subr.mxu0 0.0
      %351 = vmatpush1.msra.mxu0 0.0
      %352 = vmatprep.subr.mxu0 0.0
      %353 = vmatpush1.msra.mxu0 0.0
      %354 = vmatprep.subr.mxu0 0.0
      %355 = vmatpush1.msra.mxu0 0.0
      %356 = vmatprep.subr.mxu0 0.0
      %357 = vmatpush1.msra.mxu0 0.0
      %358 = vmatprep.subr.mxu0 0.0
      %359 = vmatpush1.msra.mxu0 0.0
      %360 = vmatprep.subr.mxu0 0.0
      %361 = vmatpush1.msra.mxu0 0.0
      %362 = vmatprep.subr.mxu0 0.0
      %363 = vmatpush1.msra.mxu0 0.0
      %364 = vmatprep.subr.mxu0 0.0
      %365 = vmatpush1.msra.mxu0 0.0
      %366 = vmatprep.subr.mxu0 0.0
      %367 = vmatpush1.msra.mxu0 0.0
      %368 = vmatprep.subr.mxu0 0.0
      %369 = vmatpush1.msra.mxu0 0.0
      %370 = vmatprep.subr.mxu0 0.0
      %371 = vmatpush1.msra.mxu0 0.0
      %372 = vmatprep.subr.mxu0 0.0
      %373 = vmatpush1.msra.mxu0 0.0
      %374 = vmatprep.subr.mxu0 0.0
      %375 = vmatpush1.msra.mxu0 0.0
      %376 = vmatprep.subr.mxu0 0.0
      %377 = vmatpush1.msra.mxu0 0.0
      %378 = vmatprep.subr.mxu0 0.0
      %379 = vmatpush1.msra.mxu0 0.0
      %380 = vmatprep.subr.mxu0 0.0
      %381 = vmatpush1.msra.mxu0 0.0
      %382 = vmatprep.subr.mxu0 0.0
      %383 = vmatpush1.msra.mxu0 0.0
      %384 = vmatprep.mubr.f32.mxu0 0.0
      %385 = vmatmul.mubr.f32.gmra.mrb[0].mxu0 %v273
      %v386 = vpop.f32.mrb[0].mxu0
      %v387 = vadd.f32 %v269, %v386
      %v388 = vpop.f32.mrb[0].mxu0
      %389 = vmatprep.mubr.f32.mxu0 0.0
      %390 = vmatmul.mubr.f32.gmra.mrb[0].mxu0 %v276
      %v391 = vpop.f32.mrb[0].mxu0
      %v392 = vadd.f32 %v269, %v391
      %v393 = vpop.f32.mrb[0].mxu0
      %394 = vmatprep.mubr.f32.mxu0 0.0
      %395 = vmatmul.mubr.f32.gmra.mrb[0].mxu0 %v279
      %v396 = vpop.f32.mrb[0].mxu0
      %v397 = vadd.f32 %v269, %v396
      %v398 = vpop.f32.mrb[0].mxu0
      %399 = vmatprep.mubr.f32.mxu0 0.0
      %400 = vmatmul.mubr.f32.gmra.mrb[0].mxu0 %v282
      %v401 = vpop.f32.mrb[0].mxu0
      %v402 = vadd.f32 %v269, %v401
      %v403 = vpop.f32.mrb[0].mxu0
      %404 = vmatprep.mubr.f32.mxu0 0.0
      %405 = vmatmul.mubr.f32.gmra.mrb[0].mxu0 %v285
      %v406 = vpop.f32.mrb[0].mxu0
      %v407 = vadd.f32 %v269, %v406
      %v408 = vpop.f32.mrb[0].mxu0
      %409 = vmatprep.mubr.f32.mxu0 0.0
      %410 = vmatmul.mubr.f32.gmra.mrb[0].mxu0 %v288
      %v411 = vpop.f32.mrb[0].mxu0
      %v412 = vadd.f32 %v269, %v411
      %v413 = vpop.f32.mrb[0].mxu0
      %414 = vmatprep.mubr.f32.mxu0 0.0
      %415 = vmatmul.mubr.f32.gmra.mrb[0].mxu0 %v291
      %v416 = vpop.f32.mrb[0].mxu0
      %v417 = vadd.f32 %v269, %v416
      %v418 = vpop.f32.mrb[0].mxu0
      %419 = vmatprep.mubr.f32.mxu0 0.0
      %420 = vmatmul.mubr.f32.gmra.mrb[0].mxu0 %v294
      %v421 = vpop.f32.mrb[0].mxu0
      %v422 = vadd.f32 %v269, %v421
      %v423 = vpop.f32.mrb[0].mxu0
      %424 = vmatprep.mubr.f32.mxu0 0.0
      %425 = vmatmul.mubr.f32.gmra.mrb[0].mxu0 %v297
      %v426 = vpop.f32.mrb[0].mxu0
      %v427 = vadd.f32 %v269, %v426
      %v428 = vpop.f32.mrb[0].mxu0
      %429 = vmatprep.mubr.f32.mxu0 0.0
      %430 = vmatmul.mubr.f32.gmra.mrb[0].mxu0 %v300
      %v431 = vpop.f32.mrb[0].mxu0
      %v432 = vadd.f32 %v269, %v431
      %v433 = vpop.f32.mrb[0].mxu0
      %434 = vmatprep.mubr.f32.mxu0 0.0
      %435 = vmatmul.mubr.f32.gmra.mrb[0].mxu0 %v303
      %v436 = vpop.f32.mrb[0].mxu0
      %v437 = vadd.f32 %v269, %v436
      %v438 = vpop.f32.mrb[0].mxu0
      %439 = vmatprep.mubr.f32.mxu0 0.0
      %440 = vmatmul.mubr.f32.gmra.mrb[0].mxu0 %v306
      %v441 = vpop.f32.mrb[0].mxu0
      %v442 = vadd.f32 %v269, %v441
      %v443 = vpop.f32.mrb[0].mxu0
      %444 = vmatprep.mubr.f32.mxu0 0.0
      %445 = vmatmul.mubr.f32.gmra.mrb[0].mxu0 %v309
      %v446 = vpop.f32.mrb[0].mxu0
      %v447 = vadd.f32 %v269, %v446
      %v448 = vpop.f32.mrb[0].mxu0
      %449 = vmatprep.mubr.f32.mxu0 0.0
      %450 = vmatmul.mubr.f32.gmra.mrb[0].mxu0 %v312
      %v451 = vpop.f32.mrb[0].mxu0
      %v452 = vadd.f32 %v269, %v451
      %v453 = vpop.f32.mrb[0].mxu0
      %454 = vmatprep.mubr.f32.mxu0 0.0
      %455 = vmatmul.mubr.f32.gmra.mrb[0].mxu0 %v315
      %v456 = vpop.f32.mrb[0].mxu0
      %v457 = vadd.f32 %v269, %v456
      %v458 = vpop.f32.mrb[0].mxu0
      %459 = vmatprep.mubr.f32.mxu0 0.0
      %460 = vmatmul.mubr.f32.gmra.mrb[0].mxu0 %v318
      %v461 = vpop.f32.mrb[0].mxu0
      %v462 = vadd.f32 %v269, %v461
      %v463 = vpop.f32.mrb[0].mxu0
      %464 = vdwg.mxu0
      %v465 = vtanh.pop %v387
      %v466 = vtanh.pop %v392
      %v467 = vtanh.pop %v397
      %v468 = vtanh.pop %v402
      %v469 = vtanh.pop %v407
      %v470 = vtanh.pop %v412
      %v471 = vtanh.pop %v417
      %v472 = vtanh.pop %v422
      %v473 = vtanh.pop %v427
      %v474 = vtanh.pop %v432
      %v475 = vtanh.pop %v437
      %v476 = vtanh.pop %v442
      %v477 = vtanh.pop %v447
      %v478 = vtanh.pop %v452
      %v479 = vtanh.pop %v457
      %v480 = vtanh.pop %v462
      %v481 = vld [vmem:[%s3] sm:$0xff]
      %v482 = vld [vmem:[%s3 + $0x8] sm:$0xff]
      %v483 = vld [vmem:[%s3 + $0x10] sm:$0xff]
      %v484 = vld [vmem:[%s3 + $0x18] sm:$0xff]
      %v485 = vld [vmem:[%s3 + $0x20] sm:$0xff]
      %v486 = vld [vmem:[%s3 + $0x28] sm:$0xff]
      %v487 = vld [vmem:[%s3 + $0x30] sm:$0xff]
      %v488 = vld [vmem:[%s3 + $0x38] sm:$0xff]
      %v489 = vld [vmem:[%s4] sm:$0x1]
      %v491 = vlaneseq
      %v492 = vshrl.u32 %v491, 7
      %v493 = vsub.s32 0, %v492
      %v494 = vrot.slane %v489, %v493
      %vm496 = vcmask 523264
      %v498 = vsel %vm496, %v465, 0
      %v501 = vsel %vm496, %v466, 0
      %v504 = vsel %vm496, %v467, 0
      %v507 = vsel %vm496, %v468, 0
      %v510 = vsel %vm496, %v469, 0
      %v513 = vsel %vm496, %v470, 0
      %v516 = vsel %vm496, %v471, 0
      %v519 = vsel %vm496, %v472, 0
      %v522 = vsel %vm496, %v473, 0
      %v525 = vsel %vm496, %v474, 0
      %v528 = vsel %vm496, %v475, 0
      %v531 = vsel %vm496, %v476, 0
      %v534 = vsel %vm496, %v477, 0
      %v537 = vsel %vm496, %v478, 0
      %v540 = vsel %vm496, %v479, 0
      %v543 = vsel %vm496, %v480, 0
      %545 = vmatprep.subr.mxu0 0.0
      %546 = vmatpush1.msra.mxu0 %v481
      %547 = vmatprep.subr.mxu0 0.0
      %548 = vmatpush1.msra.mxu0 %v482
      %549 = vmatprep.subr.mxu0 0.0
      %550 = vmatpush1.msra.mxu0 %v483
      %551 = vmatprep.subr.mxu0 0.0
      %552 = vmatpush1.msra.mxu0 %v484
      %553 = vmatprep.subr.mxu0 0.0
      %554 = vmatpush1.msra.mxu0 %v485
      %555 = vmatprep.subr.mxu0 0.0
      %556 = vmatpush1.msra.mxu0 %v486
      %557 = vmatprep.subr.mxu0 0.0
      %558 = vmatpush1.msra.mxu0 %v487
      %559 = vmatprep.subr.mxu0 0.0
      %560 = vmatpush1.msra.mxu0 %v488
      %561 = vmatprep.subr.mxu0 0.0
      %562 = vmatpush1.msra.mxu0 0.0
      %563 = vmatprep.subr.mxu0 0.0
      %564 = vmatpush1.msra.mxu0 0.0
      %565 = vmatprep.subr.mxu0 0.0
      %566 = vmatpush1.msra.mxu0 0.0
      %567 = vmatprep.subr.mxu0 0.0
      %568 = vmatpush1.msra.mxu0 0.0
      %569 = vmatprep.subr.mxu0 0.0
      %570 = vmatpush1.msra.mxu0 0.0
      %571 = vmatprep.subr.mxu0 0.0
      %572 = vmatpush1.msra.mxu0 0.0
      %573 = vmatprep.subr.mxu0 0.0
      %574 = vmatpush1.msra.mxu0 0.0
      %575 = vmatprep.subr.mxu0 0.0
      %576 = vmatpush1.msra.mxu0 0.0
      %577 = vmatprep.subr.mxu0 0.0
      %578 = vmatpush1.msra.mxu0 0.0
      %579 = vmatprep.subr.mxu0 0.0
      %580 = vmatpush1.msra.mxu0 0.0
      %581 = vmatprep.subr.mxu0 0.0
      %582 = vmatpush1.msra.mxu0 0.0
      %583 = vmatprep.subr.mxu0 0.0
      %584 = vmatpush1.msra.mxu0 0.0
      %585 = vmatprep.subr.mxu0 0.0
      %586 = vmatpush1.msra.mxu0 0.0
      %587 = vmatprep.subr.mxu0 0.0
      %588 = vmatpush1.msra.mxu0 0.0
      %589 = vmatprep.subr.mxu0 0.0
      %590 = vmatpush1.msra.mxu0 0.0
      %591 = vmatprep.subr.mxu0 0.0
      %592 = vmatpush1.msra.mxu0 0.0
      %593 = vmatprep.subr.mxu0 0.0
      %594 = vmatpush1.msra.mxu0 0.0
      %595 = vmatprep.subr.mxu0 0.0
      %596 = vmatpush1.msra.mxu0 0.0
      %597 = vmatprep.subr.mxu0 0.0
      %598 = vmatpush1.msra.mxu0 0.0
      %599 = vmatprep.subr.mxu0 0.0
      %600 = vmatpush1.msra.mxu0 0.0
      %601 = vmatprep.subr.mxu0 0.0
      %602 = vmatpush1.msra.mxu0 0.0
      %603 = vmatprep.subr.mxu0 0.0
      %604 = vmatpush1.msra.mxu0 0.0
      %605 = vmatprep.subr.mxu0 0.0
      %606 = vmatpush1.msra.mxu0 0.0
      %607 = vmatprep.subr.mxu0 0.0
      %608 = vmatpush1.msra.mxu0 0.0
      %609 = vmatprep.mubr.f32.mxu0 0.0
      %610 = vmatmul.mubr.f32.gmra.mrb[0].mxu0 %v498
      %v611 = vpop.f32.mrb[0].mxu0
      %v612 = vadd.f32 %v494, %v611
      %v613 = vpop.f32.mrb[0].mxu0
      %614 = vmatprep.mubr.f32.mxu0 0.0
      %615 = vmatmul.mubr.f32.gmra.mrb[0].mxu0 %v501
      %v616 = vpop.f32.mrb[0].mxu0
      %v617 = vadd.f32 %v494, %v616
      %v618 = vpop.f32.mrb[0].mxu0
      %619 = vmatprep.mubr.f32.mxu0 0.0
      %620 = vmatmul.mubr.f32.gmra.mrb[0].mxu0 %v504
      %v621 = vpop.f32.mrb[0].mxu0
      %v622 = vadd.f32 %v494, %v621
      %v623 = vpop.f32.mrb[0].mxu0
      %624 = vmatprep.mubr.f32.mxu0 0.0
      %625 = vmatmul.mubr.f32.gmra.mrb[0].mxu0 %v507
      %v626 = vpop.f32.mrb[0].mxu0
      %v627 = vadd.f32 %v494, %v626
      %v628 = vpop.f32.mrb[0].mxu0
      %629 = vmatprep.mubr.f32.mxu0 0.0
      %630 = vmatmul.mubr.f32.gmra.mrb[0].mxu0 %v510
      %v631 = vpop.f32.mrb[0].mxu0
      %v632 = vadd.f32 %v494, %v631
      %v633 = vpop.f32.mrb[0].mxu0
      %634 = vmatprep.mubr.f32.mxu0 0.0
      %635 = vmatmul.mubr.f32.gmra.mrb[0].mxu0 %v513
      %v636 = vpop.f32.mrb[0].mxu0
      %v637 = vadd.f32 %v494, %v636
      %v638 = vpop.f32.mrb[0].mxu0
      %639 = vmatprep.mubr.f32.mxu0 0.0
      %640 = vmatmul.mubr.f32.gmra.mrb[0].mxu0 %v516
      %v641 = vpop.f32.mrb[0].mxu0
      %v642 = vadd.f32 %v494, %v641
      %v643 = vpop.f32.mrb[0].mxu0
      %644 = vmatprep.mubr.f32.mxu0 0.0
      %645 = vmatmul.mubr.f32.gmra.mrb[0].mxu0 %v519
      %v646 = vpop.f32.mrb[0].mxu0
      %v647 = vadd.f32 %v494, %v646
      %v648 = vpop.f32.mrb[0].mxu0
      %649 = vmatprep.mubr.f32.mxu0 0.0
      %650 = vmatmul.mubr.f32.gmra.mrb[0].mxu0 %v522
      %v651 = vpop.f32.mrb[0].mxu0
      %v652 = vadd.f32 %v494, %v651
      %v653 = vpop.f32.mrb[0].mxu0
      %654 = vmatprep.mubr.f32.mxu0 0.0
      %655 = vmatmul.mubr.f32.gmra.mrb[0].mxu0 %v525
      %v656 = vpop.f32.mrb[0].mxu0
      %v657 = vadd.f32 %v494, %v656
      %v658 = vpop.f32.mrb[0].mxu0
      %659 = vmatprep.mubr.f32.mxu0 0.0
      %660 = vmatmul.mubr.f32.gmra.mrb[0].mxu0 %v528
      %v661 = vpop.f32.mrb[0].mxu0
      %v662 = vadd.f32 %v494, %v661
      %v663 = vpop.f32.mrb[0].mxu0
      %664 = vmatprep.mubr.f32.mxu0 0.0
      %665 = vmatmul.mubr.f32.gmra.mrb[0].mxu0 %v531
      %v666 = vpop.f32.mrb[0].mxu0
      %v667 = vadd.f32 %v494, %v666
      %v668 = vpop.f32.mrb[0].mxu0
      %669 = vmatprep.mubr.f32.mxu0 0.0
      %670 = vmatmul.mubr.f32.gmra.mrb[0].mxu0 %v534
      %v671 = vpop.f32.mrb[0].mxu0
      %v672 = vadd.f32 %v494, %v671
      %v673 = vpop.f32.mrb[0].mxu0
      %674 = vmatprep.mubr.f32.mxu0 0.0
      %675 = vmatmul.mubr.f32.gmra.mrb[0].mxu0 %v537
      %v676 = vpop.f32.mrb[0].mxu0
      %v677 = vadd.f32 %v494, %v676
      %v678 = vpop.f32.mrb[0].mxu0
      %679 = vmatprep.mubr.f32.mxu0 0.0
      %680 = vmatmul.mubr.f32.gmra.mrb[0].mxu0 %v540
      %v681 = vpop.f32.mrb[0].mxu0
      %v682 = vadd.f32 %v494, %v681
      %v683 = vpop.f32.mrb[0].mxu0
      %684 = vmatprep.mubr.f32.mxu0 0.0
      %685 = vmatmul.mubr.f32.gmra.mrb[0].mxu0 %v543
      %v686 = vpop.f32.mrb[0].mxu0
      %v687 = vadd.f32 %v494, %v686
      %v688 = vpop.f32.mrb[0].mxu0
      %689 = vdwg.mxu0
      %v690 = vadd.f32 %v228, %v612
      %v691 = vadd.f32 %v229, %v617
      %v692 = vadd.f32 %v230, %v622
      %v693 = vadd.f32 %v231, %v627
      %v694 = vadd.f32 %v232, %v632
      %v695 = vadd.f32 %v233, %v637
      %v696 = vadd.f32 %v234, %v642
      %v697 = vadd.f32 %v235, %v647
      %v698 = vadd.f32 %v236, %v652
      %v699 = vadd.f32 %v237, %v657
      %v700 = vadd.f32 %v238, %v662
      %v701 = vadd.f32 %v239, %v667
      %v702 = vadd.f32 %v240, %v672
      %v703 = vadd.f32 %v241, %v677
      %v704 = vadd.f32 %v242, %v682
      %v705 = vadd.f32 %v243, %v687
      %706 = vst.msk [vmem:[%s226] sm:$0xff] %vm271, %v690
      %707 = vst.msk [vmem:[%s226 + $0x8] sm:$0xff] %vm271, %v691
      %708 = vst.msk [vmem:[%s226 + $0x10] sm:$0xff] %vm271, %v692
      %709 = vst.msk [vmem:[%s226 + $0x18] sm:$0xff] %vm271, %v693
      %710 = vst.msk [vmem:[%s226 + $0x20] sm:$0xff] %vm271, %v694
      %711 = vst.msk [vmem:[%s226 + $0x28] sm:$0xff] %vm271, %v695
      %712 = vst.msk [vmem:[%s226 + $0x30] sm:$0xff] %vm271, %v696
      %713 = vst.msk [vmem:[%s226 + $0x38] sm:$0xff] %vm271, %v697
      %714 = vst.msk [vmem:[%s226 + $0x40] sm:$0xff] %vm271, %v698
      %715 = vst.msk [vmem:[%s226 + $0x48] sm:$0xff] %vm271, %v699
      %716 = vst.msk [vmem:[%s226 + $0x50] sm:$0xff] %vm271, %v700
      %717 = vst.msk [vmem:[%s226 + $0x58] sm:$0xff] %vm271, %v701
      %718 = vst.msk [vmem:[%s226 + $0x60] sm:$0xff] %vm271, %v702
      %719 = vst.msk [vmem:[%s226 + $0x68] sm:$0xff] %vm271, %v703
      %720 = vst.msk [vmem:[%s226 + $0x70] sm:$0xff] %vm271, %v704
      %721 = vst.msk [vmem:[%s226 + $0x78] sm:$0xff] %vm271, %v705
      %s722 = smul.u32 16, %s16
      %p723 = scmp.lt.s32.totalorder %s722, 31
      %s724 = scalar_select %p723, %s722, 31
      %s725 = smul.addr %s724, 8
      %s726 = scalar_lea.vmem %s5, %s725
      // Predicated region
      $region41: #{res_layer.1} parent=39 // pred_check
        %p727 = pneg %p144
      $region42: #{res_layer.1} parent=39 // pred_check_branch
        %729 = sbr.rel (%p727) target = $region44
      $region43: #{res_layer.1} parent=39 // pred_region
        %s730 = smul.u32 16, %s16
      $region44: #{res_layer.1} parent=39 // pred_fallthru
        _
    $region40: #{res_layer.1} parent=5 // pred_fallthru
      _
    %p731 = scmp.le.s32.totalorder 2, %s11
    // Predicated region
    $region45: #{res_layer.1} parent=5 // pred_check
      %p732 = pneg %p731
    $region46: #{res_layer.1} parent=5 // pred_check_branch
      %734 = sbr.rel (%p732) target = $region48
    $region47: #{res_layer.1} parent=5 // pred_region
      %s735 = ssub.s32 %s11, 2
      // Predicated region
      $region49: #{res_layer.1} parent=47 // pred_check
        %p736 = pneg %p150
      $region50: #{res_layer.1} parent=47 // pred_check_branch
        %738 = sbr.rel (%p736) target = $region52
      $region51: #{res_layer.1} parent=47 // pred_region
        %s739 = smul.u32 16, %s17
        %p740 = scmp.lt.s32.totalorder %s739, 31
        %s741 = scalar_select %p740, %s739, 31
        %s742 = smul.addr %s741, 8
        %s743 = scalar_lea.vmem %s5, %s742
      $region52: #{res_layer.1} parent=47 // pred_fallthru
        _
    $region48: #{res_layer.1} parent=5 // pred_fallthru
      _
  $region6: #{res_layer.1} parent=0 // loop_footer
    %s15 = sadd.s32 1, %s11
  $region7: #{res_layer.1} parent=0 // loop_footer_branch
    %10 = sbr.rel target = $region3
  $region8: #{res_layer.1} parent=0 // loop_exit
    _

</llo_original>
